<compile_context>
chip_gen: v6e
topology: v6e:2x2x1
jax: 0.10.0
libtpu: 0.0.40
codegen_flags: <defaults>
</compile_context>

<pallas_src>
import jax
import jax.numpy as jnp
from jax.experimental import pallas as pl
from jax.experimental.pallas import tpu as pltpu


def _conv1x1_bias_kernel(w_ref, b_ref, x_ref, o_ref):
    # w_ref: (C,) f32 in SMEM, b_ref: (1,) f32 in SMEM
    # x_ref: (1, C, T) tile of the (B, C, HWpad) input in VMEM
    # o_ref: (1, 1, T) tile of the (B, 1, HWpad) output in VMEM
    c = x_ref.shape[1]
    # Channel-unrolled scalar FMA: acc stays vreg-resident, accumulate in f32.
    acc = x_ref[0, 0:1, :].astype(jnp.float32) * w_ref[0]
    for ci in range(1, c):
        acc = acc + x_ref[0, ci:ci + 1, :].astype(jnp.float32) * w_ref[ci]
    o_ref[0] = (acc + b_ref[0]).astype(o_ref.dtype)


def _pick_hw_tile(hw_padded, c, itemsize, vmem_budget_bytes):
    """Largest lane tile (multiple of 128, divides hw_padded) whose pipelined
    VMEM footprint (sublane-padded input + output, double-buffered) fits the
    budget."""
    assert hw_padded % 128 == 0
    num_buffers = 2                      # BlockSpec double-buffering
    c_pad = ((c + 7) // 8) * 8           # second-minor dim padded to 8 sublanes
    out_pad = 8                          # (1, T) output block also pads to 8
    bytes_per_lane = (c_pad * itemsize + out_pad * itemsize) * num_buffers
    max_tile = max(128, (vmem_budget_bytes // bytes_per_lane) // 128 * 128)
    best = 128
    t = 128
    upper = min(max_tile, hw_padded)
    while t <= upper:
        if hw_padded % t == 0:
            best = t
        t += 128
    return best


def fully_con_layer_forward(x, params, *, vmem_budget_bytes=24 << 20):
    """Forward pass of fully_con_layer: 1x1 conv (C -> 1) with bias."""
    w = params["w"]          # (1, C, 1, 1) conv kernel (out_ch=1, in_ch=C, 1, 1)
    b = params["b"]          # (1,)
    bsz, c, h, wdt = x.shape

    # same_con2d padding for k_size=[1,1], stride=[1,1] is (0,0,0,0) -> identity.
    hw = h * wdt
    x3 = x.reshape(bsz, c, hw)

    # Keep the conv parameters in f32 (matches the PyTorch module even when x
    # is a narrower dtype); only the final result is cast back to x.dtype.
    w_vec = w.reshape(c).astype(jnp.float32)
    b_vec = b.reshape(1).astype(jnp.float32)

    # Pad the spatial axis to a multiple of 128 -> full-lane unmasked stores.
    hw_pad = ((hw + 127) // 128) * 128
    if hw_pad != hw:
        x3 = jnp.pad(x3, ((0, 0), (0, 0), (0, hw_pad - hw)))

    itemsize = int(jnp.dtype(x.dtype).itemsize)
    hw_tile = _pick_hw_tile(hw_pad, c, itemsize, vmem_budget_bytes)
    n_tiles = hw_pad // hw_tile
    # Larger (spatial) parallel axis leads so v7x megacore stays balanced even
    # for batch=1; no effect on single-TC v5e/v6e.
    grid = (n_tiles, bsz)

    cost = pl.CostEstimate(
        flops=2 * bsz * c * hw_pad,
        transcendentals=0,
        bytes_accessed=int((bsz * c * hw_pad + bsz * hw_pad) * itemsize + (c + 1) * 4),
    )

    out3 = pl.pallas_call(
        _conv1x1_bias_kernel,
        out_shape=jax.ShapeDtypeStruct((bsz, 1, hw_pad), x.dtype),
        grid_spec=pltpu.PrefetchScalarGridSpec(
            num_scalar_prefetch=0,
            grid=grid,
            in_specs=[
                pl.BlockSpec(memory_space=pltpu.MemorySpace.SMEM),            # weights (C,)
                pl.BlockSpec(memory_space=pltpu.MemorySpace.SMEM),            # bias (1,)
                pl.BlockSpec((1, c, hw_tile), lambda tt, bb: (bb, 0, tt)),    # x tile
            ],
            out_specs=pl.BlockSpec((1, 1, hw_tile), lambda tt, bb: (bb, 0, tt)),
        ),
        compiler_params=pltpu.CompilerParams(
            dimension_semantics=("parallel", "parallel"),
            vmem_limit_bytes=32 << 20,
        ),
        cost_estimate=cost,
    )(w_vec, b_vec, x3)

    if hw_pad != hw:
        out3 = out3[:, :, :hw]
    return out3.reshape(bsz, 1, h, wdt)


def init_params(key, channel):
    """Deterministic init mimicking torch.nn.Conv2d defaults (U(-1/sqrt(fan_in), ...))."""
    kw, kb = jax.random.split(key)
    bound = 1.0 / float(channel) ** 0.5
    w = jax.random.uniform(kw, (1, channel, 1, 1), jnp.float32, -bound, bound)
    b = jax.random.uniform(kb, (1,), jnp.float32, -bound, bound)
    return {"w": w, "b": b}


def _reference_forward(x, params):
    """Pure-JAX reference: 1x1 conv over channels with bias."""
    w2 = params["w"][:, :, 0, 0].astype(jnp.float32)     # (1, C)
    b = params["b"].astype(jnp.float32)
    y = jnp.einsum("bchw,oc->bohw", x.astype(jnp.float32), w2) + b[None, :, None, None]
    return y.astype(x.dtype)


if __name__ == "__main__":
    B, C, H, W = 2, 4, 16, 16

    key = jax.random.PRNGKey(0)
    kp, kx = jax.random.split(key)
    params = init_params(kp, C)
    x = jax.random.normal(kx, (B, C, H, W), jnp.float32)

    out = fully_con_layer_forward(x, params)
    out = jax.block_until_ready(out)

    ref = _reference_forward(x, params)
    assert out.shape == (B, 1, H, W), out.shape
    assert jnp.allclose(out, ref, atol=1e-5, rtol=1e-5), "mismatch vs pure-JAX reference"

    print("KERNEL_OK")
</pallas_src>

<mosaic_0001>
module attributes {stable_mosaic.version = 11 : i64} {
  func.func @_conv1x1_bias_kernel(%arg0: i32, %arg1: i32, %arg2: memref<4xf32, #tpu.memory_space<smem>>, %arg3: memref<1xf32, #tpu.memory_space<smem>>, %arg4: memref<1x4x256xf32, #tpu.memory_space<vmem>>, %arg5: memref<1x1x256xf32, #tpu.memory_space<vmem>>) attributes {dimension_semantics = [#tpu.dimension_semantics<parallel>, #tpu.dimension_semantics<parallel>], iteration_bounds = array<i64: 1, 2>, scalar_prefetch = 0 : i64, scratch_operands = 0 : i64, tpu.core_type = #tpu.core_type<tc>, window_params = [{transform_indices = @transform_0, window_bounds = array<i64: 4>}, {transform_indices = @transform_1, window_bounds = array<i64: 1>}, {transform_indices = @transform_2, window_bounds = array<i64: 1, 4, 256>}, {transform_indices = @transform_3, window_bounds = array<i64: 1, 1, 256>}]} {
    %c0 = arith.constant 0 : index
    %c0_0 = arith.constant 0 : index
    %c0_1 = arith.constant 0 : index
    %0 = vector.load %arg4[%c0, %c0_0, %c0_1] : memref<1x4x256xf32, #tpu.memory_space<vmem>>, vector<1x1x256xf32>
    %1 = vector.shape_cast %0 : vector<1x1x256xf32> to vector<1x256xf32>
    %c0_2 = arith.constant 0 : index
    %2 = memref.load %arg2[%c0_2] : memref<4xf32, #tpu.memory_space<smem>>
    %3 = vector.broadcast %2 : f32 to vector<1x256xf32>
    %4 = arith.mulf %1, %3 : vector<1x256xf32>
    %c0_3 = arith.constant 0 : index
    %c1 = arith.constant 1 : index
    %c0_4 = arith.constant 0 : index
    %5 = vector.load %arg4[%c0_3, %c1, %c0_4] : memref<1x4x256xf32, #tpu.memory_space<vmem>>, vector<1x1x256xf32>
    %6 = vector.shape_cast %5 : vector<1x1x256xf32> to vector<1x256xf32>
    %c1_5 = arith.constant 1 : index
    %7 = memref.load %arg2[%c1_5] : memref<4xf32, #tpu.memory_space<smem>>
    %8 = vector.broadcast %7 : f32 to vector<1x256xf32>
    %9 = arith.mulf %6, %8 : vector<1x256xf32>
    %10 = arith.addf %4, %9 : vector<1x256xf32>
    %c0_6 = arith.constant 0 : index
    %c2 = arith.constant 2 : index
    %c0_7 = arith.constant 0 : index
    %11 = vector.load %arg4[%c0_6, %c2, %c0_7] : memref<1x4x256xf32, #tpu.memory_space<vmem>>, vector<1x1x256xf32>
    %12 = vector.shape_cast %11 : vector<1x1x256xf32> to vector<1x256xf32>
    %c2_8 = arith.constant 2 : index
    %13 = memref.load %arg2[%c2_8] : memref<4xf32, #tpu.memory_space<smem>>
    %14 = vector.broadcast %13 : f32 to vector<1x256xf32>
    %15 = arith.mulf %12, %14 : vector<1x256xf32>
    %16 = arith.addf %10, %15 : vector<1x256xf32>
    %c0_9 = arith.constant 0 : index
    %c3 = arith.constant 3 : index
    %c0_10 = arith.constant 0 : index
    %17 = vector.load %arg4[%c0_9, %c3, %c0_10] : memref<1x4x256xf32, #tpu.memory_space<vmem>>, vector<1x1x256xf32>
    %18 = vector.shape_cast %17 : vector<1x1x256xf32> to vector<1x256xf32>
    %c3_11 = arith.constant 3 : index
    %19 = memref.load %arg2[%c3_11] : memref<4xf32, #tpu.memory_space<smem>>
    %20 = vector.broadcast %19 : f32 to vector<1x256xf32>
    %21 = arith.mulf %18, %20 : vector<1x256xf32>
    %22 = arith.addf %16, %21 : vector<1x256xf32>
    %c0_12 = arith.constant 0 : index
    %23 = memref.load %arg3[%c0_12] : memref<1xf32, #tpu.memory_space<smem>>
    %24 = vector.broadcast %23 : f32 to vector<1x256xf32>
    %25 = arith.addf %22, %24 : vector<1x256xf32>
    %c0_13 = arith.constant 0 : index
    %c0_14 = arith.constant 0 : index
    %c0_15 = arith.constant 0 : index
    %26 = vector.load %arg5[%c0_13, %c0_14, %c0_15] : memref<1x1x256xf32, #tpu.memory_space<vmem>>, vector<1x1x256xf32>
    %27 = vector.shape_cast %26 : vector<1x1x256xf32> to vector<1x256xf32>
    %28 = vector.shape_cast %25 : vector<1x256xf32> to vector<1x1x256xf32>
    tpu.vector_store %arg5[%c0_13, %c0_14, %c0_15], %28 {strides = array<i32>} : memref<1x1x256xf32, #tpu.memory_space<vmem>>, vector<1x1x256xf32>,
    return
  }
  func.func @transform_0(%arg0: i32, %arg1: i32) -> i32 {
    %c0_i32 = arith.constant 0 : i32
    %c0_i32_0 = arith.constant 0 : i32
    return %c0_i32 : i32
  }
  func.func @transform_1(%arg0: i32, %arg1: i32) -> i32 {
    %c0_i32 = arith.constant 0 : i32
    %c0_i32_0 = arith.constant 0 : i32
    return %c0_i32 : i32
  }
  func.func @transform_2(%arg0: i32, %arg1: i32) -> (i32, i32, i32) {
    %c0_i32 = arith.constant 0 : i32
    %c0_i32_0 = arith.constant 0 : i32
    return %arg1, %c0_i32, %arg0 : i32, i32, i32
  }
  func.func @transform_3(%arg0: i32, %arg1: i32) -> (i32, i32, i32) {
    %c0_i32 = arith.constant 0 : i32
    %c0_i32_0 = arith.constant 0 : i32
    return %arg1, %c0_i32, %arg0 : i32, i32, i32
  }
}

</mosaic_0001>

<llo_original>
// kernel: tpu_custom_call.1
$region0: #{tpu_custom_call.1}
  #allocation0 [shape = 'u32[]', space=smem, size = 0x4, offset = 0x4, fixed_abs, tag = 'smem constant byte address 0x4 - core index']
  #allocation1 [shape = 'u32[144,128]{1,0:T(1,128)}', space=vmem, size = 0x12000, scoped, tag = 'internal scratch']
  #allocation2 [shape = 'f32[1]{0:T(128)S(6)}', space=smem, size = 0x200, scoped, tag = 'scoped memory for tpu_custom_call.1']
  %s0 = inlined_call_operand.vmem [shape: f32[4], index: 0, kind: input, shape index: {}]
  %s1 = inlined_call_operand.<no memory space> [shape: f32[1], index: 1, kind: input, shape index: {}]
  %s2 = inlined_call_operand.hbm [shape: f32[2,4,256], index: 2, kind: input, shape index: {}]
  %s3 = inlined_call_operand.hbm [shape: f32[2,1,256], index: 3, kind: output, shape index: {}]
  %s4 = sld [smem:[#allocation0]]
  $region53: #{tpu_custom_call.1} parent=0
    _
  %s6 = ssub.s32 1, %s4
  %s7 = scalar_select 0, %s6, %s4
  %8 = sst [smem:[#allocation2]] %s1
  $region1: #{tpu_custom_call.1} parent=0
    #allocation3 [shape = 'u8[512]{0}', space=smem, size = 0x200, scoped, tag = 'input window, operand 0, single buffered']
    #allocation4 [shape = 's32[2]{0}', space=sflag, size = 0x8, scoped, tag = 'scoped memory for tpu_custom_call.1']
    #allocation5 [shape = 's32[2]{0}', space=sflag, size = 0x8, scoped, tag = 'scoped memory for tpu_custom_call.1']
    #allocation6 [shape = 's32[2]{0}', space=sflag, size = 0x8, scoped, tag = 'scoped memory for tpu_custom_call.1']
    #allocation7 [shape = 'u8[8192]{0}', space=vmem, size = 0x2000, scoped, tag = 'input window, operand 2']
    #allocation8 [shape = 'u8[2048]{0}', space=vmem, size = 0x800, scoped, tag = 'output window, operand 0']
    %9 = vsyncpa [#allocation6], 0
    %10 = vsyncpa [#allocation4], 0
    %s11 = scalar_lea.sflag [#allocation4], 1
    %12 = vsyncpa %s11, 0
    %13 = vsyncpa [#allocation5], 0
    %s14 = scalar_lea.sflag [#allocation5], 1
    %15 = vsyncpa %s14, 0
    loop: start=0, step=1, limit=4
    $region2: #{tpu_custom_call.1} parent=1 // loop_pre_header
      _
    $region3: #{tpu_custom_call.1} parent=1 // loop_header
      %s17 = sphi 0, %s21
      %p18 = scmp.ge.s32.totalorder %s17, 4
      %s24 = sphi 0, %s36
      %s25 = sphi 0, %s32
      %s26 = sphi 0, %s24
      %s27 = sphi 0, %s25
      %s28 = sphi 0, %s26
      %s29 = sphi 0, %s27
      %s37 = sphi 0, %s37
      %s39 = sphi 0, %s37
      %s40 = sphi 0, %s39
      %s54 = sphi 0, %s40
      %s58 = sphi 0, %s58
      %s60 = sphi 0, %s58
      %s61 = sphi 0, %s60
      %s75 = sphi 0, %s61
      %s83 = sphi 0, %s85
      %s86 = sphi 0, %s83
      %s87 = sphi 0, %s86
      %s103 = sphi 0, %s87
      %s111 = sphi 0, %s113
      %s114 = sphi 0, %s111
      %s115 = sphi 0, %s114
      %s131 = sphi 0, %s115
    $region4: #{tpu_custom_call.1} parent=1 // loop_header_branch
      %20 = sbr.rel (%p18) target = $region8
    $region5: #{tpu_custom_call.1} parent=1 // loop_body
      %s22 = ssub.s32 %s17, 1
      %s23 = ssub.s32 %s17, 2
      %s30 = sadd.s32 1, %s25
      %p31 = scmp.ge.s32.totalorder %s30, 2
      %s32 = scalar_select %p31, 0, %s30
      %s33 = sadd.s32 1, %s24
      %s34 = scalar_select %p31, %s33, %s24
      %p35 = scmp.ge.s32.totalorder %s34, 1
      %s36 = scalar_select %p35, 0, %s34
      %s38 = sadd.s32 %s37, 1
      %p41 = scmp.eq.s32.totalorder %s17, 1
      %p42 = scmp.ne.s32.totalorder %s37, %s39
      %p43 = scmp.eq.s32.totalorder %s17, 0
      %p44 = por %p42, %p43
      %p45 = scmp.ne.s32.totalorder %s37, %s39
      %p46 = scmp.eq.s32.totalorder %s22, 1
      %p47 = por %p45, %p46
      %p48 = scmp.ne.s32.totalorder %s39, %s40
      %p49 = scmp.eq.s32.totalorder %s22, 0
      %p50 = por %p48, %p49
      %p51 = scmp.ne.s32.totalorder %s39, %s40
      %p52 = scmp.eq.s32.totalorder %s23, 1
      %p53 = por %p51, %p52
      %p55 = scmp.ne.s32.totalorder %s40, %s54
      %p56 = scmp.eq.s32.totalorder %s23, 0
      %p57 = por %p55, %p56
      %s59 = sadd.s32 %s58, 1
      %p62 = scmp.eq.s32.totalorder %s17, 1
      %p63 = scmp.ne.s32.totalorder %s58, %s60
      %p64 = scmp.eq.s32.totalorder %s17, 0
      %p65 = por %p63, %p64
      %p66 = scmp.ne.s32.totalorder %s58, %s60
      %p67 = scmp.eq.s32.totalorder %s22, 1
      %p68 = por %p66, %p67
      %p69 = scmp.ne.s32.totalorder %s60, %s61
      %p70 = scmp.eq.s32.totalorder %s22, 0
      %p71 = por %p69, %p70
      %p72 = scmp.ne.s32.totalorder %s60, %s61
      %p73 = scmp.eq.s32.totalorder %s23, 1
      %p74 = por %p72, %p73
      %p76 = scmp.ne.s32.totalorder %s61, %s75
      %p77 = scmp.eq.s32.totalorder %s23, 0
      %p78 = por %p76, %p77
      %s79 = ssub.s32 %s25, %s32
      %s80 = ssub.s32 %s24, %s36
      %s81 = sor.u32 %s79, %s80
      %p82 = scmp.eq.s32.totalorder %s81, 0
      %s84 = sadd.s32 %s83, 1
      %s85 = scalar_select %p82, %s83, %s84
      %p88 = pneg %p82
      %p89 = scmp.eq.s32.totalorder %s17, 1
      %p90 = por %p88, %p89
      %p91 = scmp.ne.s32.totalorder %s83, %s86
      %p92 = scmp.eq.s32.totalorder %s17, 0
      %p93 = por %p91, %p92
      %p94 = scmp.ne.s32.totalorder %s83, %s86
      %p95 = scmp.eq.s32.totalorder %s22, 1
      %p96 = por %p94, %p95
      %p97 = scmp.ne.s32.totalorder %s86, %s87
      %p98 = scmp.eq.s32.totalorder %s22, 0
      %p99 = por %p97, %p98
      %p100 = scmp.ne.s32.totalorder %s86, %s87
      %p101 = scmp.eq.s32.totalorder %s23, 1
      %p102 = por %p100, %p101
      %p104 = scmp.ne.s32.totalorder %s87, %s103
      %p105 = scmp.eq.s32.totalorder %s23, 0
      %p106 = por %p104, %p105
      %s107 = ssub.s32 %s25, %s32
      %s108 = ssub.s32 %s24, %s36
      %s109 = sor.u32 %s107, %s108
      %p110 = scmp.eq.s32.totalorder %s109, 0
      %s112 = sadd.s32 %s111, 1
      %s113 = scalar_select %p110, %s111, %s112
      %p116 = pneg %p110
      %p117 = scmp.eq.s32.totalorder %s17, 1
      %p118 = por %p116, %p117
      %p119 = scmp.ne.s32.totalorder %s111, %s114
      %p120 = scmp.eq.s32.totalorder %s17, 0
      %p121 = por %p119, %p120
      %p122 = scmp.ne.s32.totalorder %s111, %s114
      %p123 = scmp.eq.s32.totalorder %s22, 1
      %p124 = por %p122, %p123
      %p125 = scmp.ne.s32.totalorder %s114, %s115
      %p126 = scmp.eq.s32.totalorder %s22, 0
      %p127 = por %p125, %p126
      %p128 = scmp.ne.s32.totalorder %s114, %s115
      %p129 = scmp.eq.s32.totalorder %s23, 1
      %p130 = por %p128, %p129
      %p132 = scmp.ne.s32.totalorder %s115, %s131
      %p133 = scmp.eq.s32.totalorder %s23, 0
      %p134 = por %p132, %p133
      %p135 = scmp.le.s32.totalorder 1, %s17
      %p136 = scmp.lt.s32.totalorder %s17, 3
      %p137 = pnand %p135, %p136
      %p138 = pneg %p137
      // Predicated region
      $region9: #{tpu_custom_call.1} parent=5 // pred_check
        _
      $region10: #{tpu_custom_call.1} parent=5 // pred_check_branch
        %140 = sbr.rel (%p137) target = $region12
      $region11: #{tpu_custom_call.1} parent=5 // pred_region
        %s141 = ssub.s32 %s17, 1
        // Predicated region
        $region13: #{tpu_custom_call.1} parent=11 // pred_check
          %p142 = pneg %p50
        $region14: #{tpu_custom_call.1} parent=11 // pred_check_branch
          %144 = sbr.rel (%p142) target = $region16
        $region15: #{tpu_custom_call.1} parent=11 // pred_region
          %s146 = ssub.s32 16, 16
          %147 = vsyncadd [#allocation6], %s146
          %s149 = sshll.u32 %s0, 4
          %s150 = int_to_ptr.vmem [resolvable:$true] %s149
          %152 = dma.vmem_to_smem %s150, 16, [#allocation3], [#allocation6]
        $region16: #{tpu_custom_call.1} parent=11 // pred_fallthru
          _
        // Predicated region
        $region17: #{tpu_custom_call.1} parent=11 // pred_check
          %p153 = pneg %p71
        $region18: #{tpu_custom_call.1} parent=11 // pred_check_branch
          %155 = sbr.rel (%p153) target = $region20
        $region19: #{tpu_custom_call.1} parent=11 // pred_region
          _
        $region20: #{tpu_custom_call.1} parent=11 // pred_fallthru
          _
      $region12: #{tpu_custom_call.1} parent=5 // pred_fallthru
        _
      %p156 = scmp.lt.s32.totalorder %s17, 2
      // Predicated region
      $region21: #{tpu_custom_call.1} parent=5 // pred_check
        %p157 = pneg %p156
      $region22: #{tpu_custom_call.1} parent=5 // pred_check_branch
        %159 = sbr.rel (%p157) target = $region24
      $region23: #{tpu_custom_call.1} parent=5 // pred_region
        // Predicated region
        $region25: #{tpu_custom_call.1} parent=23 // pred_check
          %p160 = pneg %p93
        $region26: #{tpu_custom_call.1} parent=23 // pred_check_branch
          %162 = sbr.rel (%p160) target = $region28
        $region27: #{tpu_custom_call.1} parent=23 // pred_region
          %s163 = sand.u32 %s83, 1
          %s164 = scalar_lea.sflag [#allocation4], %s163
          %s165 = sand.u32 %s83, 1
          %s166 = smul.addr %s165, 8
          %s167 = scalar_lea.vmem [#allocation7], %s166
          %s168 = smul.u32 2, %s24
          %s170 = ssub.s32 128, 128
          %171 = vsyncadd %s164, %s170
          %s172 = smul.addr %s25, 2
          %s173 = sadd.s32 %s168, %s172
          %s174 = smul.addr %s173, 64
          %s175 = scalar_lea.hbm %s2, %s174
          %s177 = sshll.u32 %s167, 4
          %s178 = int_to_ptr.vmem [resolvable:$true] %s177
          %180 = dma.hbm_to_vmem [thread:$0]  %s175, 128, %s178, %s164
        $region28: #{tpu_custom_call.1} parent=23 // pred_fallthru
          _
      $region24: #{tpu_custom_call.1} parent=5 // pred_fallthru
        _
      %p181 = scmp.le.s32.totalorder 1, %s17
      %p182 = scmp.lt.s32.totalorder %s17, 3
      %p183 = pnand %p181, %p182
      %p184 = pneg %p183
      // Predicated region
      $region29: #{tpu_custom_call.1} parent=5 // pred_check
        _
      $region30: #{tpu_custom_call.1} parent=5 // pred_check_branch
        %186 = sbr.rel (%p183) target = $region32
      $region31: #{tpu_custom_call.1} parent=5 // pred_region
        %s187 = ssub.s32 %s17, 1
        // Predicated region
        $region33: #{tpu_custom_call.1} parent=31 // pred_check
          %p188 = pneg %p50
        $region34: #{tpu_custom_call.1} parent=31 // pred_check_branch
          %190 = sbr.rel (%p188) target = $region36
        $region35: #{tpu_custom_call.1} parent=31 // pred_region
          %191 = dma.done [#allocation6], 16
        $region36: #{tpu_custom_call.1} parent=31 // pred_fallthru
          _
        %s192 = sand.u32 %s86, 1
        %s193 = scalar_lea.sflag [#allocation4], %s192
        %s194 = sand.u32 %s86, 1
        %s195 = smul.addr %s194, 8
        %s196 = scalar_lea.vmem [#allocation7], %s195
        // Predicated region
        $region37: #{tpu_custom_call.1} parent=31 // pred_check
          %p197 = pneg %p99
        $region38: #{tpu_custom_call.1} parent=31 // pred_check_branch
          %199 = sbr.rel (%p197) target = $region40
        $region39: #{tpu_custom_call.1} parent=31 // pred_region
          %200 = dma.done %s193, 128
        $region40: #{tpu_custom_call.1} parent=31 // pred_fallthru
          _
        %201 = sfence
        %p202 = pneg %p50
        %p203 = pneg %p47
        %p204 = pneg %p71
        %p205 = pneg %p68
        %s206 = sand.u32 %s86, 1
        %s207 = scalar_lea.sflag [#allocation4], %s206
        %s208 = sand.u32 %s86, 1
        %s209 = smul.addr %s208, 8
        %s210 = scalar_lea.vmem [#allocation7], %s209
        %p211 = pneg %p99
        %p212 = pneg %p96
        %p213 = pneg %p127
        %p214 = pneg %p124
        %s215 = sand.u32 %s114, 1
        %s216 = scalar_lea.sflag [#allocation5], %s215
        %s217 = sand.u32 %s114, 1
        %s218 = smul.addr %s217, 2
        %s219 = scalar_lea.vmem [#allocation8], %s218
        %s220 = smul.u32 2, %s26
        %s221 = smul.u32 2, %s26
        %v222 = vld [vmem:[%s196] ss:$4 sm:$0x3]
        %s223 = sld [smem:[#allocation3]]
        %v224 = vstv %s223
        %v225 = vmul.f32 %v222, %v224
        %s226 = scalar_lea.vmem %s196, 1 [#allocation7]
        %v227 = vld [vmem:[%s226] ss:$4 sm:$0x3]
        %s228 = sld [smem:[#allocation3 + $0x1]]
        %v229 = vstv %s228
        %v230 = vmul.f32 %v227, %v229
        %v231 = vadd.f32 %v225, %v230
        %s232 = scalar_lea.vmem %s196, 2 [#allocation7]
        %v233 = vld [vmem:[%s232] ss:$4 sm:$0x3]
        %s234 = sld [smem:[#allocation3 + $0x2]]
        %v235 = vstv %s234
        %v236 = vmul.f32 %v233, %v235
        %v237 = vadd.f32 %v231, %v236
        %s238 = scalar_lea.vmem %s196, 3 [#allocation7]
        %v239 = vld [vmem:[%s238] ss:$4 sm:$0x3]
        %s240 = sld [smem:[#allocation3 + $0x3]]
        %v241 = vstv %s240
        %v242 = vmul.f32 %v239, %v241
        %v243 = vadd.f32 %v237, %v242
        %s244 = sld [smem:[#allocation2]]
        %v245 = vstv %s244
        %v246 = vadd.f32 %v243, %v245
        %v247 = vlaneseq
        %vm248 = vcmp.ge.s32.totalorder %v247, 0
        %vm249 = vcmp.lt.s32.totalorder %v247, 256
        %vm250 = vmand %vm248, %vm249
        %251 = vst.msk [vmem:[%s219] sm:$0x3] %vm250, %v246
        %s252 = sand.u32 %s114, 1
        %s253 = scalar_lea.sflag [#allocation5], %s252
        %s254 = sand.u32 %s114, 1
        %s255 = smul.addr %s254, 2
        %s256 = scalar_lea.vmem [#allocation8], %s255
        // Predicated region
        $region41: #{tpu_custom_call.1} parent=31 // pred_check
          %p257 = pneg %p124
        $region42: #{tpu_custom_call.1} parent=31 // pred_check_branch
          %259 = sbr.rel (%p257) target = $region44
        $region43: #{tpu_custom_call.1} parent=31 // pred_region
          %s260 = smul.u32 2, %s26
          %s262 = ssub.s32 32, 32
          %263 = vsyncadd %s253, %s262
          %s264 = smul.addr %s27, 2
          %s265 = sadd.s32 %s260, %s264
          %s266 = smul.addr %s265, 16
          %s267 = scalar_lea.hbm %s3, %s266
          %s269 = sshll.u32 %s256, 4
          %s270 = int_to_ptr.vmem [resolvable:$true] %s269
          %272 = dma.vmem_to_hbm [thread:$0]  %s270, 32, %s267, %s253
        $region44: #{tpu_custom_call.1} parent=31 // pred_fallthru
          _
      $region32: #{tpu_custom_call.1} parent=5 // pred_fallthru
        _
      %p273 = scmp.le.s32.totalorder 2, %s17
      // Predicated region
      $region45: #{tpu_custom_call.1} parent=5 // pred_check
        %p274 = pneg %p273
      $region46: #{tpu_custom_call.1} parent=5 // pred_check_branch
        %276 = sbr.rel (%p274) target = $region48
      $region47: #{tpu_custom_call.1} parent=5 // pred_region
        %s277 = ssub.s32 %s17, 2
        // Predicated region
        $region49: #{tpu_custom_call.1} parent=47 // pred_check
          %p278 = pneg %p130
        $region50: #{tpu_custom_call.1} parent=47 // pred_check_branch
          %280 = sbr.rel (%p278) target = $region52
        $region51: #{tpu_custom_call.1} parent=47 // pred_region
          %s281 = sand.u32 %s115, 1
          %s282 = scalar_lea.sflag [#allocation5], %s281
          %s283 = sand.u32 %s115, 1
          %s284 = smul.addr %s283, 2
          %s285 = scalar_lea.vmem [#allocation8], %s284
          %286 = dma.done %s282, 32
        $region52: #{tpu_custom_call.1} parent=47 // pred_fallthru
          _
      $region48: #{tpu_custom_call.1} parent=5 // pred_fallthru
        _
    $region6: #{tpu_custom_call.1} parent=1 // loop_footer
      %s21 = sadd.s32 1, %s17
    $region7: #{tpu_custom_call.1} parent=1 // loop_footer_branch
      %16 = sbr.rel target = $region3
    $region8: #{tpu_custom_call.1} parent=1 // loop_exit
      _
    %287 = vsyncpa [#allocation4], 1
    %s288 = scalar_lea.sflag [#allocation4], 1
    %289 = vsyncpa %s288, 1
    %290 = vsyncpa [#allocation5], 1
    %s291 = scalar_lea.sflag [#allocation5], 1
    %292 = vsyncpa %s291, 1
    %293 = vsyncpa [#allocation6], 1
    %s294 = scalar_lea.sflag [#allocation6], 1
    %295 = vsyncpa %s294, 1

</llo_original>
